<compile_context>
chip_gen: v5e
topology: v5e:2x2
jax: 0.10.0
libtpu: 0.0.40
codegen_flags: <defaults>
</compile_context>

<pallas_src>
import functools

import jax
import jax.numpy as jnp
from jax import lax
from jax.experimental import pallas as pl
from jax.experimental.pallas import tpu as pltpu


def _round_up(x, m):
    return ((x + m - 1) // m) * m


# --------------------------------------------------------------------------- #
# Kernel
# --------------------------------------------------------------------------- #
def _pam_attn_kernel(xf_ref, w_ref, b_ref, o_ref, qkv_scr, *,
                     ckp, m_valid, use_bf16_exp, persistent):
    """One (local block, batch, query-tile) grid step.

    xf_ref  : (1, 1, C, Mp) bf16 pooled features of the whole local block
              (index_map is qi-invariant -> DMA'd once per (blk, b))
    w_ref   : (Cqkv, C) bf16 fused [wq*scale ; wk ; wv] (BN folded, zero-padded)
    b_ref   : (Cqkv, 1) f32 fused biases
    o_ref   : (1, 1, Cvp, TQ) bf16 attention context for this query tile
    qkv_scr : (Cqkv, Mp) bf16 VMEM scratch holding the fused Q/K/V projection
    """
    qi = pl.program_id(2)
    tq = o_ref.shape[-1]
    mp = qkv_scr.shape[-1]
    cvp = qkv_scr.shape[0] - 2 * ckp

    def project():
        x = xf_ref[0, 0]                                            # (C, Mp)
        qkv = jnp.dot(w_ref[...], x,
                      preferred_element_type=jnp.float32) + b_ref[...]
        qkv_scr[...] = qkv.astype(qkv_scr.dtype)

    if persistent:
        # q-tile axis is innermost & "arbitrary": project once per (blk, b).
        @pl.when(qi == 0)
        def _():
            project()
    else:
        # Occupancy fallback (nblk*B < 2): recompute QKV every step so all
        # grid axes can be marked parallel (2nd TensorCore on v7x stays busy).
        project()

    start = pl.multiple_of(qi * tq, tq)
    q = qkv_scr[pl.ds(0, ckp), pl.ds(start, tq)]                    # (Ckp, TQ)
    k = qkv_scr[pl.ds(ckp, ckp), :]                                 # (Ckp, Mp)
    v = qkv_scr[pl.ds(2 * ckp, cvp), :]                             # (Cvp, Mp)

    # energy[i, j] = sum_c q[c, i] * k[c, j] -- contract the channel axis.
    energy = lax.dot_general(q, k, (((0,), (0,)), ((), ())),
                             preferred_element_type=jnp.float32)    # (TQ, Mp)
    if m_valid < mp:
        kpos = lax.broadcasted_iota(jnp.int32, (tq, mp), 1)
        energy = jnp.where(kpos < m_valid, energy, -1e30)

    # Stable softmax over keys; exp in bf16 on chips with a bf16 EUP.
    energy = energy - jnp.max(energy, axis=-1, keepdims=True)
    if use_bf16_exp:
        p = jnp.exp(energy.astype(jnp.bfloat16))
        denom = jnp.sum(p.astype(jnp.float32), axis=-1, keepdims=True)
    else:
        p = jnp.exp(energy)
        denom = jnp.sum(p, axis=-1, keepdims=True)
    attn = (p * pl.reciprocal(denom, approx=True)).astype(jnp.bfloat16)

    # out[c, i] = sum_j v[c, j] * attn[i, j] -- contract the key axis.
    ctx = lax.dot_general(v, attn, (((1,), (1,)), ((), ())),
                          preferred_element_type=jnp.float32)       # (Cvp, TQ)
    o_ref[0, 0] = ctx.astype(o_ref.dtype)


# --------------------------------------------------------------------------- #
# Hardware introspection (best effort, safe fallbacks)
# --------------------------------------------------------------------------- #
def _tpu_generation():
    vmem_cap = 128 * 1024 * 1024
    try:
        vmem_cap = int(getattr(pltpu.get_tpu_info(), "vmem_capacity_bytes",
                               vmem_cap))
    except Exception:
        pass
    pre_v6 = False
    try:
        kind = jax.devices()[0].device_kind.lower()
        pre_v6 = any(tag in kind for tag in ("v2", "v3", "v4", "v5"))
    except Exception:
        pass
    return vmem_cap, pre_v6


# --------------------------------------------------------------------------- #
# Wrapper
# --------------------------------------------------------------------------- #
def pam_forward(x, params, *, key_channels, value_channels, scale=1, ds=1,
                eps=1e-5):
    """_PAMBlock forward. x: (B, C, H, 2W) float32 -> (B, Cv, H, 2W) float32."""
    (wq, bq, gq, betaq, mq, varq,
     wk, bk, gk, betak, mk, vark,
     wv, bv) = params

    B, C, H, W2 = x.shape
    assert W2 % 2 == 0
    if ds != 1:
        # TODO(synk): PyTorch AvgPool2d floors non-divisible H/W; we require
        # divisibility instead.
        assert H % ds == 0 and W2 % ds == 0
        Hp, Wp2 = H // ds, W2 // ds
        xp = x.reshape(B, C, Hp, ds, Wp2, ds).mean(axis=(3, 5))
    else:
        Hp, Wp2 = H, W2
        xp = x
    h, w = Hp, Wp2 // 2
    # TODO(synk): ragged last block (h % scale or w % scale != 0) with the
    # PyTorch min/end logic is not implemented; require divisible partitions.
    assert h % scale == 0 and w % scale == 0
    bh, bw = h // scale, w // scale
    M = bh * bw * 2
    nblk = scale * scale
    Cv = value_channels

    # ---- fold eval-mode BatchNorm into the query/key 1x1 convs, and fold the
    #      softmax scale key_channels**-0.5 into the query weights -------------
    sq = gq / jnp.sqrt(varq + eps)
    wq_f = wq * sq[:, None]
    bq_f = sq * (bq - mq) + betaq
    sk = gk / jnp.sqrt(vark + eps)
    wk_f = wk * sk[:, None]
    bk_f = sk * (bk - mk) + betak
    attn_scale = float(key_channels) ** (-0.5)
    wq_f = wq_f * attn_scale
    bq_f = bq_f * attn_scale

    # ---- fused QKV weights, zero-padded to bf16-friendly multiples of 16 -----
    Ckp = _round_up(max(key_channels, 1), 16)
    Cvp = _round_up(max(value_channels, 1), 16)
    Cqkv = 2 * Ckp + Cvp
    pad_k = Ckp - key_channels
    pad_v = Cvp - value_channels
    w_fused = jnp.concatenate([
        jnp.pad(wq_f, ((0, pad_k), (0, 0))),
        jnp.pad(wk_f, ((0, pad_k), (0, 0))),
        jnp.pad(wv, ((0, pad_v), (0, 0))),
    ], axis=0).astype(jnp.bfloat16)                                  # (Cqkv, C)
    b_fused = jnp.concatenate([
        jnp.pad(bq_f, (0, pad_k)),
        jnp.pad(bk_f, (0, pad_k)),
        jnp.pad(bv, (0, pad_v)),
    ]).reshape(Cqkv, 1).astype(jnp.float32)                          # (Cqkv, 1)

    # ---- generation-aware tiling / budget -------------------------------------
    vmem_cap, pre_v6 = _tpu_generation()
    Mp = _round_up(M, 128)                       # lane-dense keys & output tiles
    if pre_v6:
        TQ = 128                                 # 128-wide MXU, 1 vst slot (v5e)
    elif Mp % 256 == 0 and not (vmem_cap <= (64 << 20) and Mp >= 4096):
        TQ = 256
    else:
        TQ = 128
    nq = Mp // TQ
    use_bf16_exp = not pre_v6                    # bf16 EUP only on v6e / v7x

    # ---- layout: (nblk, B, C, Mp) bf16.  Attention is permutation-invariant
    #      over the positions of a block, so for scale == 1 the natural
    #      row-major flattening of (h, 2w) is used -> zero-transpose in & out. --
    xp_b = xp.astype(jnp.bfloat16)
    if scale == 1:
        xin = xp_b.reshape(1, B, C, M)
    else:
        xr = xp_b.reshape(B, C, scale, bh, 2, scale, bw)
        xin = xr.transpose(2, 5, 0, 1, 4, 3, 6).reshape(nblk, B, C, M)
    if Mp > M:
        xin = jnp.pad(xin, ((0, 0), (0, 0), (0, 0), (0, Mp - M)))

    # ---- occupancy fallback for single-(blk, b) grids --------------------------
    recompute = (nblk * B) < 2
    semantics = ("parallel", "parallel",
                 "parallel" if recompute else "arbitrary")

    # ---- VMEM budget (explicit double buffers, no blanket 2x) ------------------
    p_bytes = 2 if use_bf16_exp else 4
    est = (2 * C * Mp * 2                        # xf block (bf16, 2 bufs)
           + 2 * Cvp * TQ * 2                    # out tile (bf16, 2 bufs)
           + 2 * (Cqkv * C * 2 + Cqkv * 4)       # fused weights + biases (2 bufs)
           + Cqkv * Mp * 2                       # qkv scratch (bf16)
           + Cqkv * Mp * 4                       # fp32 projection temporary
           + TQ * Mp * (4 + p_bytes + 2)         # energy (f32) + p + attn (bf16)
           + Ckp * TQ * 2 + Cvp * TQ * 4)        # q slice + fp32 ctx
    vmem_limit = int(min(max(int(1.5 * est) + (2 << 20), 16 << 20),
                         int(0.75 * vmem_cap)))

    kernel = functools.partial(_pam_attn_kernel, ckp=Ckp, m_valid=M,
                               use_bf16_exp=use_bf16_exp,
                               persistent=not recompute)

    # NOTE: weight/bias index_maps are constant, so Pallas does not re-DMA them
    # across grid steps; their (tiny) second buffer is left at the default depth
    # for compile safety instead of pipeline_mode=pl.Buffered(1).
    out = pl.pallas_call(
        kernel,
        out_shape=jax.ShapeDtypeStruct((nblk, B, Cvp, Mp), jnp.bfloat16),
        grid=(nblk, B, nq),
        in_specs=[
            pl.BlockSpec((1, 1, C, Mp), lambda blk, b, qi: (blk, b, 0, 0)),
            pl.BlockSpec((Cqkv, C), lambda blk, b, qi: (0, 0)),
            pl.BlockSpec((Cqkv, 1), lambda blk, b, qi: (0, 0)),
        ],
        out_specs=pl.BlockSpec((1, 1, Cvp, TQ),
                               lambda blk, b, qi: (blk, b, 0, qi)),
        scratch_shapes=[pltpu.VMEM((Cqkv, Mp), jnp.bfloat16)],
        compiler_params=pltpu.CompilerParams(
            dimension_semantics=semantics,
            vmem_limit_bytes=vmem_limit),
    )(xin, w_fused, b_fused)

    # ---- drop channel / position padding, reassemble to (B, Cv, h, 2w) ---------
    out = out[:, :, :Cv, :M]
    if scale == 1:
        ctx = out.reshape(B, Cv, h, 2 * w)
    else:
        ctx = out.reshape(scale, scale, B, Cv, 2, bh, bw)
        ctx = ctx.transpose(2, 3, 0, 5, 4, 1, 6).reshape(B, Cv, h, 2 * w)

    # ---- nearest upsample (F.interpolate default) as one broadcast+reshape -----
    if ds != 1:
        ctx = jnp.broadcast_to(
            ctx[:, :, :, None, :, None],
            (B, Cv, h, ds, 2 * w, ds)).reshape(B, Cv, h * ds, 2 * w * ds)
    return ctx.astype(jnp.float32)


# --------------------------------------------------------------------------- #
# Pure-JAX reference (mirrors the PyTorch forward, eval-mode BN)
# --------------------------------------------------------------------------- #
def pam_reference(x, params, *, key_channels, value_channels, scale=1, ds=1,
                  eps=1e-5):
    (wq, bq, gq, betaq, mq, varq,
     wk, bk, gk, betak, mk, vark,
     wv, bv) = params
    B, C, H, W2 = x.shape
    if ds != 1:
        Hp, Wp2 = H // ds, W2 // ds
        xp = x.reshape(B, C, Hp, ds, Wp2, ds).mean(axis=(3, 5))
    else:
        xp = x
    h, w = xp.shape[2], xp.shape[3] // 2

    def conv1x1(inp, w_, b_):
        return jnp.einsum("oc,bchw->bohw", w_, inp) + b_[None, :, None, None]

    def bn(inp, gamma, beta, mean, var):
        s = gamma / jnp.sqrt(var + eps)
        return (inp - mean[None, :, None, None]) * s[None, :, None, None] \
            + beta[None, :, None, None]

    value = conv1x1(xp, wv, bv)
    query = bn(conv1x1(xp, wq, bq), gq, betaq, mq, varq)
    key = bn(conv1x1(xp, wk, bk), gk, betak, mk, vark)

    value = jnp.stack([value[:, :, :, :w], value[:, :, :, w:]], axis=4)
    query = jnp.stack([query[:, :, :, :w], query[:, :, :, w:]], axis=4)
    key = jnp.stack([key[:, :, :, :w], key[:, :, :, w:]], axis=4)

    step_h, step_w = h // scale, w // scale
    blocks = []
    for i in range(scale):
        for j in range(scale):
            sx, ex = i * step_h, h if i == scale - 1 else (i + 1) * step_h
            sy, ey = j * step_w, w if j == scale - 1 else (j + 1) * step_w
            v_l = value[:, :, sx:ex, sy:ey]
            q_l = query[:, :, sx:ex, sy:ey]
            k_l = key[:, :, sx:ex, sy:ey]
            bh, bw = v_l.shape[2], v_l.shape[3]
            M = bh * bw * 2
            v_f = v_l.reshape(B, value_channels, M)
            q_f = q_l.reshape(B, key_channels, M).transpose(0, 2, 1)
            k_f = k_l.reshape(B, key_channels, M)
            sim = jnp.einsum("bmc,bcn->bmn", q_f, k_f) * (key_channels ** -0.5)
            sim = jax.nn.softmax(sim, axis=-1)
            ctx = jnp.einsum("bcn,bmn->bcm", v_f, sim)
            blocks.append(ctx.reshape(B, value_channels, bh, bw, 2))

    rows = [jnp.concatenate(blocks[i * scale:(i + 1) * scale], axis=3)
            for i in range(scale)]
    context = jnp.concatenate(rows, axis=2)                   # (B, Cv, h, w, 2)
    context = jnp.concatenate([context[..., 0], context[..., 1]], axis=3)
    if ds != 1:
        context = jnp.repeat(jnp.repeat(context, ds, axis=2), ds, axis=3)
    return context


# --------------------------------------------------------------------------- #
# Parameters
# --------------------------------------------------------------------------- #
def init_params(key, in_channels, key_channels, value_channels):
    """Conv1x1 weights/biases + BatchNorm (running stats) for query/key."""
    ks = jax.random.split(key, 14)
    wq = 0.1 * jax.random.normal(ks[0], (key_channels, in_channels), jnp.float32)
    bq = 0.1 * jax.random.normal(ks[1], (key_channels,), jnp.float32)
    gq = 1.0 + 0.1 * jax.random.normal(ks[2], (key_channels,), jnp.float32)
    betaq = 0.1 * jax.random.normal(ks[3], (key_channels,), jnp.float32)
    mq = 0.1 * jax.random.normal(ks[4], (key_channels,), jnp.float32)
    varq = 0.5 + jax.random.uniform(ks[5], (key_channels,), jnp.float32)

    wk = 0.1 * jax.random.normal(ks[6], (key_channels, in_channels), jnp.float32)
    bk = 0.1 * jax.random.normal(ks[7], (key_channels,), jnp.float32)
    gk = 1.0 + 0.1 * jax.random.normal(ks[8], (key_channels,), jnp.float32)
    betak = 0.1 * jax.random.normal(ks[9], (key_channels,), jnp.float32)
    mk = 0.1 * jax.random.normal(ks[10], (key_channels,), jnp.float32)
    vark = 0.5 + jax.random.uniform(ks[11], (key_channels,), jnp.float32)

    wv = 0.1 * jax.random.normal(ks[12], (value_channels, in_channels),
                                 jnp.float32)
    bv = 0.1 * jax.random.normal(ks[13], (value_channels,), jnp.float32)
    return (wq, bq, gq, betaq, mq, varq,
            wk, bk, gk, betak, mk, vark,
            wv, bv)


if __name__ == "__main__":
    # Input is (B, C, H, 2*W) like the PyTorch module. key_channels=4 exercises
    # the channel zero-padding path.
    B, C, H, W = 2, 16, 16, 16
    KEY_C, VAL_C = 4, 16

    key = jax.random.PRNGKey(0)
    kx, kp = jax.random.split(key)
    x = jax.random.normal(kx, (B, C, H, 2 * W), jnp.float32)
    params = init_params(kp, C, KEY_C, VAL_C)

    # (scale=1, ds=2): pooled 8x16 -> one block, M=128 (zero-transpose path).
    # (scale=2, ds=1): full-res 16x32 -> four blocks of M=128 each.
    # (scale=2, ds=2): pooled 8x16 -> four blocks, M=32 padded to 128 (masking).
    for (scale, ds) in [(1, 2), (2, 1), (2, 2)]:
        out = pam_forward(x, params, key_channels=KEY_C, value_channels=VAL_C,
                          scale=scale, ds=ds)
        out = jax.block_until_ready(out)
        ref = pam_reference(x, params, key_channels=KEY_C, value_channels=VAL_C,
                            scale=scale, ds=ds)
        assert out.shape == ref.shape, (out.shape, ref.shape)
        assert jnp.allclose(out, ref, rtol=2e-2, atol=2e-2), \
            f"mismatch vs reference (scale={scale}, ds={ds})"

    # B=1, scale=1: exercises the occupancy fallback (QKV recomputed per tile,
    # fully parallel grid).
    out1 = pam_forward(x[:1], params, key_channels=KEY_C, value_channels=VAL_C,
                       scale=1, ds=2)
    out1 = jax.block_until_ready(out1)
    ref1 = pam_reference(x[:1], params, key_channels=KEY_C, value_channels=VAL_C,
                         scale=1, ds=2)
    assert out1.shape == ref1.shape
    assert jnp.allclose(out1, ref1, rtol=2e-2, atol=2e-2), "mismatch (B=1 path)"

    print("KERNEL_OK")
</pallas_src>

<mosaic_0001>
module attributes {stable_mosaic.version = 11 : i64} {
  func.func @_pam_attn_kernel(%arg0: i32, %arg1: i32, %arg2: i32, %arg3: memref<1x1x16x128xbf16, #tpu.memory_space<vmem>>, %arg4: memref<48x16xbf16, #tpu.memory_space<vmem>>, %arg5: memref<48x1xf32, #tpu.memory_space<vmem>>, %arg6: memref<1x1x16x128xbf16, #tpu.memory_space<vmem>>, %arg7: memref<48x128xbf16, #tpu.memory_space<vmem>>) attributes {dimension_semantics = [#tpu.dimension_semantics<parallel>, #tpu.dimension_semantics<parallel>, #tpu.dimension_semantics<arbitrary>], iteration_bounds = array<i64: 1, 2, 1>, scalar_prefetch = 0 : i64, scratch_operands = 1 : i64, tpu.core_type = #tpu.core_type<tc>, window_params = [{transform_indices = @transform_0, window_bounds = array<i64: 1, 1, 16, 128>}, {pipeline_mode = #tpu.pipeline_mode<synchronous>, transform_indices = @transform_1, window_bounds = array<i64: 48, 16>}, {pipeline_mode = #tpu.pipeline_mode<synchronous>, transform_indices = @transform_2, window_bounds = array<i64: 48, 1>}, {transform_indices = @transform_3, window_bounds = array<i64: 1, 1, 16, 128>}]} {
    %c0_i32 = arith.constant 0 : i32
    %0 = arith.cmpi eq, %arg2, %c0_i32 : i32
    %1 = arith.extui %0 : i1 to i32
    %c0_i32_0 = arith.constant 0 : i32
    %2 = arith.cmpi ne, %1, %c0_i32_0 : i32
    scf.if %2 {
      %c0_10 = arith.constant 0 : index
      %c0_11 = arith.constant 0 : index
      %c0_12 = arith.constant 0 : index
      %c0_13 = arith.constant 0 : index
      %29 = vector.load %arg3[%c0_10, %c0_11, %c0_12, %c0_13] : memref<1x1x16x128xbf16, #tpu.memory_space<vmem>>, vector<1x1x16x128xbf16>
      %30 = vector.shape_cast %29 : vector<1x1x16x128xbf16> to vector<16x128xbf16>
      %c0_14 = arith.constant 0 : index
      %c0_15 = arith.constant 0 : index
      %31 = vector.load %arg4[%c0_14, %c0_15] : memref<48x16xbf16, #tpu.memory_space<vmem>>, vector<48x16xbf16>
      %cst_16 = arith.constant dense<0.000000e+00> : vector<48x128xf32>
      %32 = tpu.matmul %31, %30, %cst_16 {dimension_numbers = #tpu.dot_dimension_numbers<[1], [0], [0], [1], [0, 0, 1, 1], [], []>} : vector<48x16xbf16>, vector<16x128xbf16>, vector<48x128xf32> -> vector<48x128xf32>
      %c0_17 = arith.constant 0 : index
      %c0_18 = arith.constant 0 : index
      %33 = vector.load %arg5[%c0_17, %c0_18] : memref<48x1xf32, #tpu.memory_space<vmem>>, vector<48x1xf32>
      %34 = vector.broadcast %33 : vector<48x1xf32> to vector<48x128xf32>
      %35 = arith.addf %32, %34 : vector<48x128xf32>
      %36 = arith.truncf %35 : vector<48x128xf32> to vector<48x128xbf16>
      %c0_19 = arith.constant 0 : index
      %c0_20 = arith.constant 0 : index
      %37 = vector.load %arg7[%c0_19, %c0_20] : memref<48x128xbf16, #tpu.memory_space<vmem>>, vector<48x128xbf16>
      tpu.vector_store %arg7[%c0_19, %c0_20], %36 {strides = array<i32>} : memref<48x128xbf16, #tpu.memory_space<vmem>>, vector<48x128xbf16>,
    } else {
    }
    %c128_i32 = arith.constant 128 : i32
    %3 = arith.muli %arg2, %c128_i32 : i32
    %4 = tpu.assume_multiple %3, 128 : i32
    %c0 = arith.constant 0 : index
    %5 = arith.index_cast %4 : i32 to index
    %6 = vector.load %arg7[%c0, %5] : memref<48x128xbf16, #tpu.memory_space<vmem>>, vector<16x128xbf16>
    %c16 = arith.constant 16 : index
    %c0_1 = arith.constant 0 : index
    %7 = vector.load %arg7[%c16, %c0_1] : memref<48x128xbf16, #tpu.memory_space<vmem>>, vector<16x128xbf16>
    %c32 = arith.constant 32 : index
    %c0_2 = arith.constant 0 : index
    %8 = vector.load %arg7[%c32, %c0_2] : memref<48x128xbf16, #tpu.memory_space<vmem>>, vector<16x128xbf16>
    %cst = arith.constant dense<0.000000e+00> : vector<128x128xf32>
    %9 = tpu.matmul %6, %7, %cst {dimension_numbers = #tpu.dot_dimension_numbers<[0], [0], [1], [1], [0, 1, 1, 1], [], []>} : vector<16x128xbf16>, vector<16x128xbf16>, vector<128x128xf32> -> vector<128x128xf32>
    %cst_3 = arith.constant dense<0xFF800000> : vector<128xf32>
    %10 = vector.multi_reduction <maximumf>, %9, %cst_3 [1] : vector<128x128xf32> to vector<128xf32>
    %11 = vector.shape_cast %10 : vector<128xf32> to vector<128x1xf32>
    %12 = vector.broadcast %11 : vector<128x1xf32> to vector<128x128xf32>
    %13 = arith.subf %9, %12 : vector<128x128xf32>
    %14 = arith.truncf %13 : vector<128x128xf32> to vector<128x128xbf16>
    %15 = math.exp %14 : vector<128x128xbf16>
    %16 = arith.extf %15 : vector<128x128xbf16> to vector<128x128xf32>
    %cst_4 = arith.constant dense<0.000000e+00> : vector<128xf32>
    %17 = vector.multi_reduction <add>, %16, %cst_4 [1] : vector<128x128xf32> to vector<128xf32>
    %18 = vector.shape_cast %17 : vector<128xf32> to vector<128x1xf32>
    %19 = tpu.reciprocal %18 {approx = true} : vector<128x1xf32> -> vector<128x1xf32>
    %20 = arith.extf %15 : vector<128x128xbf16> to vector<128x128xf32>
    %21 = vector.broadcast %19 : vector<128x1xf32> to vector<128x128xf32>
    %22 = arith.mulf %20, %21 : vector<128x128xf32>
    %23 = arith.truncf %22 : vector<128x128xf32> to vector<128x128xbf16>
    %cst_5 = arith.constant dense<0.000000e+00> : vector<16x128xf32>
    %24 = tpu.matmul %8, %23, %cst_5 {dimension_numbers = #tpu.dot_dimension_numbers<[1], [1], [0], [0], [0, 0, 1, 0], [], []>} : vector<16x128xbf16>, vector<128x128xbf16>, vector<16x128xf32> -> vector<16x128xf32>
    %25 = arith.truncf %24 : vector<16x128xf32> to vector<16x128xbf16>
    %c0_6 = arith.constant 0 : index
    %c0_7 = arith.constant 0 : index
    %c0_8 = arith.constant 0 : index
    %c0_9 = arith.constant 0 : index
    %26 = vector.load %arg6[%c0_6, %c0_7, %c0_8, %c0_9] : memref<1x1x16x128xbf16, #tpu.memory_space<vmem>>, vector<1x1x16x128xbf16>
    %27 = vector.shape_cast %26 : vector<1x1x16x128xbf16> to vector<16x128xbf16>
    %28 = vector.shape_cast %25 : vector<16x128xbf16> to vector<1x1x16x128xbf16>
    tpu.vector_store %arg6[%c0_6, %c0_7, %c0_8, %c0_9], %28 {strides = array<i32>} : memref<1x1x16x128xbf16, #tpu.memory_space<vmem>>, vector<1x1x16x128xbf16>,
    return
  }
  func.func @transform_0(%arg0: i32, %arg1: i32, %arg2: i32) -> (i32, i32, i32, i32) {
    %c0_i32 = arith.constant 0 : i32
    %c0_i32_0 = arith.constant 0 : i32
    %c0_i32_1 = arith.constant 0 : i32
    return %arg0, %arg1, %c0_i32, %c0_i32_0 : i32, i32, i32, i32
  }
  func.func @transform_1(%arg0: i32, %arg1: i32, %arg2: i32) -> (i32, i32) {
    %c0_i32 = arith.constant 0 : i32
    %c0_i32_0 = arith.constant 0 : i32
    %c0_i32_1 = arith.constant 0 : i32
    return %c0_i32, %c0_i32_0 : i32, i32
  }
  func.func @transform_2(%arg0: i32, %arg1: i32, %arg2: i32) -> (i32, i32) {
    %c0_i32 = arith.constant 0 : i32
    %c0_i32_0 = arith.constant 0 : i32
    %c0_i32_1 = arith.constant 0 : i32
    return %c0_i32, %c0_i32_0 : i32, i32
  }
  func.func @transform_3(%arg0: i32, %arg1: i32, %arg2: i32) -> (i32, i32, i32, i32) {
    %c0_i32 = arith.constant 0 : i32
    %c0_i32_0 = arith.constant 0 : i32
    return %arg0, %arg1, %c0_i32, %arg2 : i32, i32, i32, i32
  }
}

</mosaic_0001>

<llo_original>
// kernel: tpu_custom_call.1
$region0: #{tpu_custom_call.1}
  #allocation0 [shape = 'u32[]', space=smem, size = 0x4, offset = 0x4, fixed_abs, tag = 'smem constant byte address 0x4 - core index']
  #allocation1 [shape = 'u32[72,128]{1,0:T(1,128)}', space=vmem, size = 0x9000, scoped, tag = 'internal scratch']
  #allocation2 [shape = 'bf16[48,128]{1,0:T(8,128)(2,1)}', space=vmem, size = 0x3000, scoped, tag = 'scratch operand']
  %s0 = inlined_call_operand.vmem [shape: bf16[1,2,16,128], index: 0, kind: input, shape index: {}]
  %s1 = inlined_call_operand.vmem [shape: bf16[48,16], index: 1, kind: input, shape index: {}]
  %s2 = inlined_call_operand.vmem [shape: f32[48,1], index: 2, kind: input, shape index: {}]
  %s3 = inlined_call_operand.hbm [shape: bf16[1,2,16,128], index: 3, kind: output, shape index: {}]
  %s4 = sld [smem:[#allocation0]]
  $region49: #{tpu_custom_call.1} parent=0
    _
  %s6 = ssub.s32 1, %s4
  %s7 = scalar_select 0, %s6, %s4
  $region1: #{tpu_custom_call.1} parent=0
    #allocation3 [shape = 'u8[8192]{0}', space=vmem, size = 0x2000, scoped, tag = 'output window, operand 0']
    #allocation4 [shape = 's32[2]{0}', space=sflag, size = 0x8, scoped, tag = 'scoped memory for tpu_custom_call.1']
    %8 = vsyncpa [#allocation4], 0
    %s9 = scalar_lea.sflag [#allocation4], 1
    %10 = vsyncpa %s9, 0
    loop: start=0, step=1, limit=4
    $region2: #{tpu_custom_call.1} parent=1 // loop_pre_header
      _
    $region3: #{tpu_custom_call.1} parent=1 // loop_header
      %s12 = sphi 0, %s16
      %p13 = scmp.ge.s32.totalorder %s12, 4
      %s19 = sphi 0, %s38
      %s20 = sphi 0, %s34
      %s21 = sphi 0, %s30
      %s22 = sphi 0, %s19
      %s23 = sphi 0, %s20
      %s24 = sphi 0, %s21
      %s25 = sphi 0, %s22
      %s26 = sphi 0, %s23
      %s27 = sphi 0, %s24
      %s43 = sphi 0, %s45
      %s46 = sphi 0, %s43
      %s47 = sphi 0, %s46
      %s63 = sphi 0, %s47
      %s67 = sphi 0, %s67
      %s69 = sphi 0, %s67
      %s70 = sphi 0, %s69
      %s84 = sphi 0, %s70
      %s88 = sphi 0, %s88
      %s90 = sphi 0, %s88
      %s91 = sphi 0, %s90
      %s105 = sphi 0, %s91
      %s115 = sphi 0, %s117
      %s118 = sphi 0, %s115
      %s119 = sphi 0, %s118
      %s135 = sphi 0, %s119
    $region4: #{tpu_custom_call.1} parent=1 // loop_header_branch
      %15 = sbr.rel (%p13) target = $region8
    $region5: #{tpu_custom_call.1} parent=1 // loop_body
      %s17 = ssub.s32 %s12, 1
      %s18 = ssub.s32 %s12, 2
      %s28 = sadd.s32 1, %s21
      %p29 = scmp.ge.s32.totalorder %s28, 1
      %s30 = scalar_select %p29, 0, %s28
      %s31 = sadd.s32 1, %s20
      %s32 = scalar_select %p29, %s31, %s20
      %p33 = scmp.ge.s32.totalorder %s32, 2
      %s34 = scalar_select %p33, 0, %s32
      %s35 = sadd.s32 1, %s19
      %s36 = scalar_select %p33, %s35, %s19
      %p37 = scmp.ge.s32.totalorder %s36, 1
      %s38 = scalar_select %p37, 0, %s36
      %s39 = ssub.s32 %s19, %s38
      %s40 = ssub.s32 %s20, %s34
      %s41 = sor.u32 %s39, %s40
      %p42 = scmp.eq.s32.totalorder %s41, 0
      %s44 = sadd.s32 %s43, 1
      %s45 = scalar_select %p42, %s43, %s44
      %p48 = pneg %p42
      %p49 = scmp.eq.s32.totalorder %s12, 1
      %p50 = por %p48, %p49
      %p51 = scmp.ne.s32.totalorder %s43, %s46
      %p52 = scmp.eq.s32.totalorder %s12, 0
      %p53 = por %p51, %p52
      %p54 = scmp.ne.s32.totalorder %s43, %s46
      %p55 = scmp.eq.s32.totalorder %s17, 1
      %p56 = por %p54, %p55
      %p57 = scmp.ne.s32.totalorder %s46, %s47
      %p58 = scmp.eq.s32.totalorder %s17, 0
      %p59 = por %p57, %p58
      %p60 = scmp.ne.s32.totalorder %s46, %s47
      %p61 = scmp.eq.s32.totalorder %s18, 1
      %p62 = por %p60, %p61
      %p64 = scmp.ne.s32.totalorder %s47, %s63
      %p65 = scmp.eq.s32.totalorder %s18, 0
      %p66 = por %p64, %p65
      %s68 = sadd.s32 %s67, 1
      %p71 = scmp.eq.s32.totalorder %s12, 1
      %p72 = scmp.ne.s32.totalorder %s67, %s69
      %p73 = scmp.eq.s32.totalorder %s12, 0
      %p74 = por %p72, %p73
      %p75 = scmp.ne.s32.totalorder %s67, %s69
      %p76 = scmp.eq.s32.totalorder %s17, 1
      %p77 = por %p75, %p76
      %p78 = scmp.ne.s32.totalorder %s69, %s70
      %p79 = scmp.eq.s32.totalorder %s17, 0
      %p80 = por %p78, %p79
      %p81 = scmp.ne.s32.totalorder %s69, %s70
      %p82 = scmp.eq.s32.totalorder %s18, 1
      %p83 = por %p81, %p82
      %p85 = scmp.ne.s32.totalorder %s70, %s84
      %p86 = scmp.eq.s32.totalorder %s18, 0
      %p87 = por %p85, %p86
      %s89 = sadd.s32 %s88, 1
      %p92 = scmp.eq.s32.totalorder %s12, 1
      %p93 = scmp.ne.s32.totalorder %s88, %s90
      %p94 = scmp.eq.s32.totalorder %s12, 0
      %p95 = por %p93, %p94
      %p96 = scmp.ne.s32.totalorder %s88, %s90
      %p97 = scmp.eq.s32.totalorder %s17, 1
      %p98 = por %p96, %p97
      %p99 = scmp.ne.s32.totalorder %s90, %s91
      %p100 = scmp.eq.s32.totalorder %s17, 0
      %p101 = por %p99, %p100
      %p102 = scmp.ne.s32.totalorder %s90, %s91
      %p103 = scmp.eq.s32.totalorder %s18, 1
      %p104 = por %p102, %p103
      %p106 = scmp.ne.s32.totalorder %s91, %s105
      %p107 = scmp.eq.s32.totalorder %s18, 0
      %p108 = por %p106, %p107
      %s109 = ssub.s32 %s19, %s38
      %s110 = ssub.s32 %s20, %s34
      %s111 = sor.u32 %s109, %s110
      %s112 = ssub.s32 %s21, %s30
      %s113 = sor.u32 %s111, %s112
      %p114 = scmp.eq.s32.totalorder %s113, 0
      %s116 = sadd.s32 %s115, 1
      %s117 = scalar_select %p114, %s115, %s116
      %p120 = pneg %p114
      %p121 = scmp.eq.s32.totalorder %s12, 1
      %p122 = por %p120, %p121
      %p123 = scmp.ne.s32.totalorder %s115, %s118
      %p124 = scmp.eq.s32.totalorder %s12, 0
      %p125 = por %p123, %p124
      %p126 = scmp.ne.s32.totalorder %s115, %s118
      %p127 = scmp.eq.s32.totalorder %s17, 1
      %p128 = por %p126, %p127
      %p129 = scmp.ne.s32.totalorder %s118, %s119
      %p130 = scmp.eq.s32.totalorder %s17, 0
      %p131 = por %p129, %p130
      %p132 = scmp.ne.s32.totalorder %s118, %s119
      %p133 = scmp.eq.s32.totalorder %s18, 1
      %p134 = por %p132, %p133
      %p136 = scmp.ne.s32.totalorder %s119, %s135
      %p137 = scmp.eq.s32.totalorder %s18, 0
      %p138 = por %p136, %p137
      %p139 = scmp.le.s32.totalorder 1, %s12
      %p140 = scmp.lt.s32.totalorder %s12, 3
      %p141 = pnand %p139, %p140
      %p142 = pneg %p141
      // Predicated region
      $region9: #{tpu_custom_call.1} parent=5 // pred_check
        _
      $region10: #{tpu_custom_call.1} parent=5 // pred_check_branch
        %144 = sbr.rel (%p141) target = $region12
      $region11: #{tpu_custom_call.1} parent=5 // pred_region
        %s145 = ssub.s32 %s12, 1
        // Predicated region
        $region13: #{tpu_custom_call.1} parent=11 // pred_check
          %p146 = pneg %p80
        $region14: #{tpu_custom_call.1} parent=11 // pred_check_branch
          %148 = sbr.rel (%p146) target = $region16
        $region15: #{tpu_custom_call.1} parent=11 // pred_region
          _
        $region16: #{tpu_custom_call.1} parent=11 // pred_fallthru
          _
        // Predicated region
        $region17: #{tpu_custom_call.1} parent=11 // pred_check
          %p149 = pneg %p101
        $region18: #{tpu_custom_call.1} parent=11 // pred_check_branch
          %151 = sbr.rel (%p149) target = $region20
        $region19: #{tpu_custom_call.1} parent=11 // pred_region
          _
        $region20: #{tpu_custom_call.1} parent=11 // pred_fallthru
          _
      $region12: #{tpu_custom_call.1} parent=5 // pred_fallthru
        _
      %p152 = scmp.lt.s32.totalorder %s12, 2
      // Predicated region
      $region21: #{tpu_custom_call.1} parent=5 // pred_check
        %p153 = pneg %p152
      $region22: #{tpu_custom_call.1} parent=5 // pred_check_branch
        %155 = sbr.rel (%p153) target = $region24
      $region23: #{tpu_custom_call.1} parent=5 // pred_region
        // Predicated region
        $region25: #{tpu_custom_call.1} parent=23 // pred_check
          %p156 = pneg %p53
        $region26: #{tpu_custom_call.1} parent=23 // pred_check_branch
          %158 = sbr.rel (%p156) target = $region28
        $region27: #{tpu_custom_call.1} parent=23 // pred_region
          %p159 = scmp.lt.s32.totalorder %s19, 0
          %s160 = scalar_select %p159, %s19, 0
          %p161 = scmp.lt.s32.totalorder %s20, 1
          %s162 = scalar_select %p161, %s20, 1
          %s163 = smul.addr %s162, 2
          %s164 = smul.addr %s160, 4
          %s165 = sadd.s32 %s163, %s164
          %s166 = smul.addr %s165, 4
          %s167 = scalar_lea.vmem %s0, %s166
        $region28: #{tpu_custom_call.1} parent=23 // pred_fallthru
          _
      $region24: #{tpu_custom_call.1} parent=5 // pred_fallthru
        _
      %p168 = scmp.le.s32.totalorder 1, %s12
      %p169 = scmp.lt.s32.totalorder %s12, 3
      %p170 = pnand %p168, %p169
      %p171 = pneg %p170
      // Predicated region
      $region29: #{tpu_custom_call.1} parent=5 // pred_check
        _
      $region30: #{tpu_custom_call.1} parent=5 // pred_check_branch
        %173 = sbr.rel (%p170) target = $region32
      $region31: #{tpu_custom_call.1} parent=5 // pred_region
        %s174 = ssub.s32 %s12, 1
        %p175 = scmp.lt.s32.totalorder %s22, 0
        %s176 = scalar_select %p175, %s22, 0
        %p177 = scmp.lt.s32.totalorder %s23, 1
        %s178 = scalar_select %p177, %s23, 1
        %s179 = smul.addr %s178, 2
        %s180 = smul.addr %s176, 4
        %s181 = sadd.s32 %s179, %s180
        %s182 = smul.addr %s181, 4
        %s183 = scalar_lea.vmem %s0, %s182
        %p184 = pneg %p59
        %p185 = pneg %p56
        %p186 = pneg %p80
        %p187 = pneg %p77
        %p188 = pneg %p101
        %p189 = pneg %p98
        %p190 = pneg %p131
        %p191 = pneg %p128
        %s192 = sand.u32 %s118, 1
        %s193 = scalar_lea.sflag [#allocation4], %s192
        %s194 = sand.u32 %s118, 1
        %s195 = smul.addr %s194, 8
        %s196 = scalar_lea.vmem [#allocation3], %s195
        %p197 = scmp.lt.s32.totalorder %s22, 0
        %s198 = scalar_select %p197, %s22, 0
        %p199 = scmp.lt.s32.totalorder %s23, 1
        %s200 = scalar_select %p199, %s23, 1
        %s201 = smul.addr %s200, 2
        %s202 = smul.addr %s198, 4
        %s203 = sadd.s32 %s201, %s202
        %s204 = smul.addr %s203, 4
        %s205 = scalar_lea.vmem %s0, %s204
        %p207 = scmp.eq.s32.totalorder %s24, 0
        // Predicated region
        $region33: #{tpu_custom_call.1} parent=31 // pred_check
          %p208 = pneg %p207
        $region34: #{tpu_custom_call.1} parent=31 // pred_check_branch
          %210 = sbr.rel (%p208) target = $region36
        $region35: #{tpu_custom_call.1} parent=31 // pred_region
          %v211 = vld [vmem:[%s205] sm:$0xf]
          %v212 = vld [vmem:[%s205 + $0x4] sm:$0xf]
          %v213 = vld [vmem:[%s1] sm:$0xf]
          %v214 = vld [vmem:[%s1 + $0x4] sm:$0xf]
          %v215 = vld [vmem:[%s1 + $0x8] sm:$0xf]
          %v216 = vld [vmem:[%s1 + $0xc] sm:$0xf]
          %v217 = vld [vmem:[%s1 + $0x10] sm:$0xf]
          %v218 = vld [vmem:[%s1 + $0x14] sm:$0xf]
          %v219 = vld [vmem:[%s2] sm:$0xff]
          %v220 = vld [vmem:[%s2 + $0x8] sm:$0xff]
          %v221 = vld [vmem:[%s2 + $0x10] sm:$0xff]
          %v222 = vld [vmem:[%s2 + $0x18] sm:$0xff]
          %v223 = vld [vmem:[%s2 + $0x20] sm:$0xff]
          %v224 = vld [vmem:[%s2 + $0x28] sm:$0xff]
          %226 = vset.pattern.permute.xlu0 0
          %227 = vperm.xlu0 %226, %v219
          %v228 = vpop.permute.xlu0 %227
          %231 = vset.pattern.permute.xlu0 0
          %232 = vperm.xlu0 %231, %v220
          %v233 = vpop.permute.xlu0 %232
          %236 = vset.pattern.permute.xlu0 0
          %237 = vperm.xlu0 %236, %v221
          %v238 = vpop.permute.xlu0 %237
          %241 = vset.pattern.permute.xlu0 0
          %242 = vperm.xlu0 %241, %v222
          %v243 = vpop.permute.xlu0 %242
          %246 = vset.pattern.permute.xlu0 0
          %247 = vperm.xlu0 %246, %v223
          %v248 = vpop.permute.xlu0 %247
          %251 = vset.pattern.permute.xlu0 0
          %252 = vperm.xlu0 %251, %v224
          %v253 = vpop.permute.xlu0 %252
          %v261 = vunpack.c.l.b16 %v213
          %v262 = vunpack.c.l.b16 %v214
          %v263 = vunpack.c.l.b16 %v215
          %v264 = vunpack.c.l.b16 %v216
          %v265 = vunpack.c.l.b16 %v217
          %v266 = vunpack.c.l.b16 %v218
          %v267 = vpack.c.b16 %v262, %v261
          %v268 = vpack.c.b16 %v264, %v263
          %v269 = vpack.c.b16 %v266, %v265
          %v272 = vunpack.c.l.b16 %v211
          %v273 = vunpack.c.l.b16 %v212
          %v274 = vpack.c.b16 %v273, %v272
          %vm276 = vcmask 130048
          %v278 = vsel %vm276, %v267, 0
          %v281 = vsel %vm276, %v268, 0
          %v284 = vsel %vm276, %v269, 0
          %286 = vmatpush.bf16.msra.mxu0 0
          %287 = vmatpush.bf16.msra.mxu0 0
          %288 = vmatpush.bf16.msra.mxu0 0
          %289 = vmatpush.bf16.msra.mxu0 0
          %290 = vmatpush.bf16.msra.mxu0 0
          %291 = vmatpush.bf16.msra.mxu0 0
          %292 = vmatpush.bf16.msra.mxu0 0
          %293 = vmatpush.bf16.msra.mxu0 %v274
          %294 = vmatmul.bf16.gmra.mxu0 %v278
          %v295 = vpop.f32.mrf.mxu0
          %v296 = vadd.f32 %v228, %v295
          %v297 = vpop.f32.mrf.mxu0
          %v298 = vadd.f32 %v233, %v297
          %299 = vmatmul.bf16.gmra.mxu0 %v281
          %v300 = vpop.f32.mrf.mxu0
          %v301 = vadd.f32 %v238, %v300
          %v302 = vpop.f32.mrf.mxu0
          %v303 = vadd.f32 %v243, %v302
          %304 = vmatmul.bf16.gmra.mxu0 %v284
          %v305 = vpop.f32.mrf.mxu0
          %v306 = vadd.f32 %v248, %v305
          %v307 = vpop.f32.mrf.mxu0
          %v308 = vadd.f32 %v253, %v307
          %309 = vdwg.mxu0
          %v310 = vpack.c.bf16 %v296, %v296
          %v311 = vpack.c.bf16 %v298, %v298
          %v312 = vpack.c.bf16 %v301, %v301
          %v313 = vpack.c.bf16 %v303, %v303
          %v314 = vpack.c.bf16 %v306, %v306
          %v315 = vpack.c.bf16 %v308, %v308
          %316 = vst [vmem:[#allocation2] sm:$0xf] %v310
          %317 = vst [vmem:[#allocation2 + $0x4] sm:$0xf] %v311
          %318 = vst [vmem:[#allocation2 + $0x8] sm:$0xf] %v312
          %319 = vst [vmem:[#allocation2 + $0xc] sm:$0xf] %v313
          %320 = vst [vmem:[#allocation2 + $0x10] sm:$0xf] %v314
          %321 = vst [vmem:[#allocation2 + $0x14] sm:$0xf] %v315
        $region36: #{tpu_custom_call.1} parent=31 // pred_fallthru
          _
        %s322 = smul.u32 %s24, 128
        %s323 = sshra.s32 %s322, 7
        %s324 = sand.u32 %s322, 127
        %s325 = smul.addr %s323, 4
        %s326 = scalar_lea.vmem [#allocation2], %s325
        %v327 = vld [vmem:[%s326] sm:$0xf]
        %v328 = vld [vmem:[%s326 + $0x4] sm:$0xf]
        %v329 = vld [vmem:[#allocation2 + $0x8] sm:$0xf]
        %v330 = vld [vmem:[#allocation2 + $0xc] sm:$0xf]
        %v331 = vld [vmem:[#allocation2 + $0x10] sm:$0xf]
        %v332 = vld [vmem:[#allocation2 + $0x14] sm:$0xf]
        %v335 = vunpack.c.l.b16 %v327
        %v336 = vunpack.c.l.b16 %v328
        %v337 = vpack.c.b16 %v336, %v335
        %339 = vxpose.xlu0.c.b16.start [1/8] %v337, 128
        %340 = vxpose.xlu0.c.b16.cont [2/8] 0, 128
        %341 = vxpose.xlu0.c.b16.cont [3/8] 0, 128
        %342 = vxpose.xlu0.c.b16.cont [4/8] 0, 128
        %343 = vxpose.xlu0.c.b16.cont [5/8] 0, 128
        %344 = vxpose.xlu0.c.b16.cont [6/8] 0, 128
        %345 = vxpose.xlu0.c.b16.cont [7/8] 0, 128
        %346 = vxpose.xlu0.c.b16.end [8/8] 0, 128
        %v347 = vpop.trf.xlu0
        %v348 = vpop.trf.xlu0
        %v349 = vpop.trf.xlu0
        %v350 = vpop.trf.xlu0
        %v351 = vpop.trf.xlu0
        %v352 = vpop.trf.xlu0
        %v353 = vpop.trf.xlu0
        %v354 = vpop.trf.xlu0
        %v357 = vunpack.c.l.b16 %v329
        %v358 = vunpack.c.l.b16 %v330
        %v359 = vpack.c.b16 %v358, %v357
        %vm361 = vcmask 130048
        %v363 = vsel %vm361, %v347, 0
        %v366 = vsel %vm361, %v348, 0
        %v369 = vsel %vm361, %v349, 0
        %v372 = vsel %vm361, %v350, 0
        %v375 = vsel %vm361, %v351, 0
        %v378 = vsel %vm361, %v352, 0
        %v381 = vsel %vm361, %v353, 0
        %v384 = vsel %vm361, %v354, 0
        %386 = vmatpush.bf16.msra.mxu0 0
        %387 = vmatpush.bf16.msra.mxu0 0
        %388 = vmatpush.bf16.msra.mxu0 0
        %389 = vmatpush.bf16.msra.mxu0 0
        %390 = vmatpush.bf16.msra.mxu0 0
        %391 = vmatpush.bf16.msra.mxu0 0
        %392 = vmatpush.bf16.msra.mxu0 0
        %393 = vmatpush.bf16.msra.mxu0 %v359
        %394 = vmatmul.bf16.gmra.mxu0 %v363
        %v395 = vpop.f32.mrf.mxu0
        %v396 = vadd.f32 0.0, %v395
        %v397 = vpop.f32.mrf.mxu0
        %v398 = vadd.f32 0.0, %v397
        %399 = vmatmul.bf16.gmra.mxu0 %v366
        %v400 = vpop.f32.mrf.mxu0
        %v401 = vadd.f32 0.0, %v400
        %v402 = vpop.f32.mrf.mxu0
        %v403 = vadd.f32 0.0, %v402
        %404 = vmatmul.bf16.gmra.mxu0 %v369
        %v405 = vpop.f32.mrf.mxu0
        %v406 = vadd.f32 0.0, %v405
        %v407 = vpop.f32.mrf.mxu0
        %v408 = vadd.f32 0.0, %v407
        %409 = vmatmul.bf16.gmra.mxu0 %v372
        %v410 = vpop.f32.mrf.mxu0
        %v411 = vadd.f32 0.0, %v410
        %v412 = vpop.f32.mrf.mxu0
        %v413 = vadd.f32 0.0, %v412
        %414 = vmatmul.bf16.gmra.mxu0 %v375
        %v415 = vpop.f32.mrf.mxu0
        %v416 = vadd.f32 0.0, %v415
        %v417 = vpop.f32.mrf.mxu0
        %v418 = vadd.f32 0.0, %v417
        %419 = vmatmul.bf16.gmra.mxu0 %v378
        %v420 = vpop.f32.mrf.mxu0
        %v421 = vadd.f32 0.0, %v420
        %v422 = vpop.f32.mrf.mxu0
        %v423 = vadd.f32 0.0, %v422
        %424 = vmatmul.bf16.gmra.mxu0 %v381
        %v425 = vpop.f32.mrf.mxu0
        %v426 = vadd.f32 0.0, %v425
        %v427 = vpop.f32.mrf.mxu0
        %v428 = vadd.f32 0.0, %v427
        %429 = vmatmul.bf16.gmra.mxu0 %v384
        %v430 = vpop.f32.mrf.mxu0
        %v431 = vadd.f32 0.0, %v430
        %v432 = vpop.f32.mrf.mxu0
        %v433 = vadd.f32 0.0, %v432
        %434 = vdwg.mxu0
        %435 = vmax.xlane.f32.xlu0 %v396
        %v436 = vpop.xlane.xlu0 %435
        %437 = vmax.xlane.f32.xlu0 %v398
        %v438 = vpop.xlane.xlu0 %437
        %439 = vmax.xlane.f32.xlu0 %v401
        %v440 = vpop.xlane.xlu0 %439
        %441 = vmax.xlane.f32.xlu0 %v403
        %v442 = vpop.xlane.xlu0 %441
        %443 = vmax.xlane.f32.xlu0 %v406
        %v444 = vpop.xlane.xlu0 %443
        %445 = vmax.xlane.f32.xlu0 %v408
        %v446 = vpop.xlane.xlu0 %445
        %447 = vmax.xlane.f32.xlu0 %v411
        %v448 = vpop.xlane.xlu0 %447
        %449 = vmax.xlane.f32.xlu0 %v413
        %v450 = vpop.xlane.xlu0 %449
        %451 = vmax.xlane.f32.xlu0 %v416
        %v452 = vpop.xlane.xlu0 %451
        %453 = vmax.xlane.f32.xlu0 %v418
        %v454 = vpop.xlane.xlu0 %453
        %455 = vmax.xlane.f32.xlu0 %v421
        %v456 = vpop.xlane.xlu0 %455
        %457 = vmax.xlane.f32.xlu0 %v423
        %v458 = vpop.xlane.xlu0 %457
        %459 = vmax.xlane.f32.xlu0 %v426
        %v460 = vpop.xlane.xlu0 %459
        %461 = vmax.xlane.f32.xlu0 %v428
        %v462 = vpop.xlane.xlu0 %461
        %463 = vmax.xlane.f32.xlu0 %v431
        %v464 = vpop.xlane.xlu0 %463
        %465 = vmax.xlane.f32.xlu0 %v433
        %v466 = vpop.xlane.xlu0 %465
        %v467 = vsub.f32 %v396, %v436
        %v468 = vsub.f32 %v398, %v438
        %v469 = vsub.f32 %v401, %v440
        %v470 = vsub.f32 %v403, %v442
        %v471 = vsub.f32 %v406, %v444
        %v472 = vsub.f32 %v408, %v446
        %v473 = vsub.f32 %v411, %v448
        %v474 = vsub.f32 %v413, %v450
        %v475 = vsub.f32 %v416, %v452
        %v476 = vsub.f32 %v418, %v454
        %v477 = vsub.f32 %v421, %v456
        %v478 = vsub.f32 %v423, %v458
        %v479 = vsub.f32 %v426, %v460
        %v480 = vsub.f32 %v428, %v462
        %v481 = vsub.f32 %v431, %v464
        %v482 = vsub.f32 %v433, %v466
        %v483 = vpack.c.bf16 %v467, %v467
        %v484 = vpack.c.bf16 %v468, %v468
        %v485 = vpack.c.bf16 %v469, %v469
        %v486 = vpack.c.bf16 %v470, %v470
        %v487 = vpack.c.bf16 %v471, %v471
        %v488 = vpack.c.bf16 %v472, %v472
        %v489 = vpack.c.bf16 %v473, %v473
        %v490 = vpack.c.bf16 %v474, %v474
        %v491 = vpack.c.bf16 %v475, %v475
        %v492 = vpack.c.bf16 %v476, %v476
        %v493 = vpack.c.bf16 %v477, %v477
        %v494 = vpack.c.bf16 %v478, %v478
        %v495 = vpack.c.bf16 %v479, %v479
        %v496 = vpack.c.bf16 %v480, %v480
        %v497 = vpack.c.bf16 %v481, %v481
        %v498 = vpack.c.bf16 %v482, %v482
        %v499 = vunpack.c.l.bf16 %v483
        %v500 = vunpack.c.l.bf16 %v484
        %v501 = vunpack.c.l.bf16 %v485
        %v502 = vunpack.c.l.bf16 %v486
        %v503 = vunpack.c.l.bf16 %v487
        %v504 = vunpack.c.l.bf16 %v488
        %v505 = vunpack.c.l.bf16 %v489
        %v506 = vunpack.c.l.bf16 %v490
        %v507 = vunpack.c.l.bf16 %v491
        %v508 = vunpack.c.l.bf16 %v492
        %v509 = vunpack.c.l.bf16 %v493
        %v510 = vunpack.c.l.bf16 %v494
        %v511 = vunpack.c.l.bf16 %v495
        %v512 = vunpack.c.l.bf16 %v496
        %v513 = vunpack.c.l.bf16 %v497
        %v514 = vunpack.c.l.bf16 %v498
        %v515 = vmul.f32 %v499, 1.442695
        %v516 = vpow.pop %v515
        %v517 = vmul.f32 %v500, 1.442695
        %v518 = vpow.pop %v517
        %v519 = vmul.f32 %v501, 1.442695
        %v520 = vpow.pop %v519
        %v521 = vmul.f32 %v502, 1.442695
        %v522 = vpow.pop %v521
        %v523 = vmul.f32 %v503, 1.442695
        %v524 = vpow.pop %v523
        %v525 = vmul.f32 %v504, 1.442695
        %v526 = vpow.pop %v525
        %v527 = vmul.f32 %v505, 1.442695
        %v528 = vpow.pop %v527
        %v529 = vmul.f32 %v506, 1.442695
        %v530 = vpow.pop %v529
        %v531 = vmul.f32 %v507, 1.442695
        %v532 = vpow.pop %v531
        %v533 = vmul.f32 %v508, 1.442695
        %v534 = vpow.pop %v533
        %v535 = vmul.f32 %v509, 1.442695
        %v536 = vpow.pop %v535
        %v537 = vmul.f32 %v510, 1.442695
        %v538 = vpow.pop %v537
        %v539 = vmul.f32 %v511, 1.442695
        %v540 = vpow.pop %v539
        %v541 = vmul.f32 %v512, 1.442695
        %v542 = vpow.pop %v541
        %v543 = vmul.f32 %v513, 1.442695
        %v544 = vpow.pop %v543
        %v545 = vmul.f32 %v514, 1.442695
        %v546 = vpow.pop %v545
        %v547 = vpack.c.bf16 %v516, %v516
        %v548 = vpack.c.bf16 %v518, %v518
        %v549 = vpack.c.bf16 %v520, %v520
        %v550 = vpack.c.bf16 %v522, %v522
        %v551 = vpack.c.bf16 %v524, %v524
        %v552 = vpack.c.bf16 %v526, %v526
        %v553 = vpack.c.bf16 %v528, %v528
        %v554 = vpack.c.bf16 %v530, %v530
        %v555 = vpack.c.bf16 %v532, %v532
        %v556 = vpack.c.bf16 %v534, %v534
        %v557 = vpack.c.bf16 %v536, %v536
        %v558 = vpack.c.bf16 %v538, %v538
        %v559 = vpack.c.bf16 %v540, %v540
        %v560 = vpack.c.bf16 %v542, %v542
        %v561 = vpack.c.bf16 %v544, %v544
        %v562 = vpack.c.bf16 %v546, %v546
        %v563 = vunpack.c.l.bf16 %v547
        %v564 = vunpack.c.l.bf16 %v548
        %v565 = vunpack.c.l.bf16 %v549
        %v566 = vunpack.c.l.bf16 %v550
        %v567 = vunpack.c.l.bf16 %v551
        %v568 = vunpack.c.l.bf16 %v552
        %v569 = vunpack.c.l.bf16 %v553
        %v570 = vunpack.c.l.bf16 %v554
        %v571 = vunpack.c.l.bf16 %v555
        %v572 = vunpack.c.l.bf16 %v556
        %v573 = vunpack.c.l.bf16 %v557
        %v574 = vunpack.c.l.bf16 %v558
        %v575 = vunpack.c.l.bf16 %v559
        %v576 = vunpack.c.l.bf16 %v560
        %v577 = vunpack.c.l.bf16 %v561
        %v578 = vunpack.c.l.bf16 %v562
        %579 = vadd.xlane.f32.xlu0 %v563
        %v580 = vpop.xlane.xlu0 %579
        %581 = vadd.xlane.f32.xlu0 %v564
        %v582 = vpop.xlane.xlu0 %581
        %583 = vadd.xlane.f32.xlu0 %v565
        %v584 = vpop.xlane.xlu0 %583
        %585 = vadd.xlane.f32.xlu0 %v566
        %v586 = vpop.xlane.xlu0 %585
        %587 = vadd.xlane.f32.xlu0 %v567
        %v588 = vpop.xlane.xlu0 %587
        %589 = vadd.xlane.f32.xlu0 %v568
        %v590 = vpop.xlane.xlu0 %589
        %591 = vadd.xlane.f32.xlu0 %v569
        %v592 = vpop.xlane.xlu0 %591
        %593 = vadd.xlane.f32.xlu0 %v570
        %v594 = vpop.xlane.xlu0 %593
        %595 = vadd.xlane.f32.xlu0 %v571
        %v596 = vpop.xlane.xlu0 %595
        %597 = vadd.xlane.f32.xlu0 %v572
        %v598 = vpop.xlane.xlu0 %597
        %599 = vadd.xlane.f32.xlu0 %v573
        %v600 = vpop.xlane.xlu0 %599
        %601 = vadd.xlane.f32.xlu0 %v574
        %v602 = vpop.xlane.xlu0 %601
        %603 = vadd.xlane.f32.xlu0 %v575
        %v604 = vpop.xlane.xlu0 %603
        %605 = vadd.xlane.f32.xlu0 %v576
        %v606 = vpop.xlane.xlu0 %605
        %607 = vadd.xlane.f32.xlu0 %v577
        %v608 = vpop.xlane.xlu0 %607
        %609 = vadd.xlane.f32.xlu0 %v578
        %v610 = vpop.xlane.xlu0 %609
        %v611 = vrcp.pop %v580
        %v612 = vrcp.pop %v582
        %v613 = vrcp.pop %v584
        %v614 = vrcp.pop %v586
        %v615 = vrcp.pop %v588
        %v616 = vrcp.pop %v590
        %v617 = vrcp.pop %v592
        %v618 = vrcp.pop %v594
        %v619 = vrcp.pop %v596
        %v620 = vrcp.pop %v598
        %v621 = vrcp.pop %v600
        %v622 = vrcp.pop %v602
        %v623 = vrcp.pop %v604
        %v624 = vrcp.pop %v606
        %v625 = vrcp.pop %v608
        %v626 = vrcp.pop %v610
        %v627 = vmul.f32 %v563, %v611
        %v628 = vmul.f32 %v564, %v612
        %v629 = vmul.f32 %v565, %v613
        %v630 = vmul.f32 %v566, %v614
        %v631 = vmul.f32 %v567, %v615
        %v632 = vmul.f32 %v568, %v616
        %v633 = vmul.f32 %v569, %v617
        %v634 = vmul.f32 %v570, %v618
        %v635 = vmul.f32 %v571, %v619
        %v636 = vmul.f32 %v572, %v620
        %v637 = vmul.f32 %v573, %v621
        %v638 = vmul.f32 %v574, %v622
        %v639 = vmul.f32 %v575, %v623
        %v640 = vmul.f32 %v576, %v624
        %v641 = vmul.f32 %v577, %v625
        %v642 = vmul.f32 %v578, %v626
        %v643 = vpack.c.bf16 %v628, %v627
        %v644 = vpack.c.bf16 %v630, %v629
        %v645 = vpack.c.bf16 %v632, %v631
        %v646 = vpack.c.bf16 %v634, %v633
        %v647 = vpack.c.bf16 %v636, %v635
        %v648 = vpack.c.bf16 %v638, %v637
        %v649 = vpack.c.bf16 %v640, %v639
        %v650 = vpack.c.bf16 %v642, %v641
        %v653 = vunpack.c.l.b16 %v331
        %v654 = vunpack.c.l.b16 %v332
        %v655 = vpack.c.b16 %v654, %v653
        %657 = vmatpush.bf16.xpose.msra.mxu0 %v650
        %658 = vmatpush.bf16.xpose.msra.mxu0 %v649
        %659 = vmatpush.bf16.xpose.msra.mxu0 %v648
        %660 = vmatpush.bf16.xpose.msra.mxu0 %v647
        %661 = vmatpush.bf16.xpose.msra.mxu0 %v646
        %662 = vmatpush.bf16.xpose.msra.mxu0 %v645
        %663 = vmatpush.bf16.xpose.msra.mxu0 %v644
        %664 = vmatpush.bf16.xpose.msra.mxu0 %v643
        %665 = vmatmul.bf16.gmra.mxu0 %v655
        %v666 = vpop.f32.mrf.mxu0
        %v667 = vadd.f32 0.0, %v666
        %v668 = vpop.f32.mrf.mxu0
        %v669 = vadd.f32 0.0, %v668
        %670 = vdwg.mxu0
        %v671 = vpack.c.bf16 %v667, %v667
        %v672 = vpack.c.bf16 %v669, %v669
        %673 = vst [vmem:[%s196] sm:$0xf] %v671
        %674 = vst [vmem:[%s196 + $0x4] sm:$0xf] %v672
        %s675 = sand.u32 %s118, 1
        %s676 = scalar_lea.sflag [#allocation4], %s675
        %s677 = sand.u32 %s118, 1
        %s678 = smul.addr %s677, 8
        %s679 = scalar_lea.vmem [#allocation3], %s678
        // Predicated region
        $region37: #{tpu_custom_call.1} parent=31 // pred_check
          %p680 = pneg %p128
        $region38: #{tpu_custom_call.1} parent=31 // pred_check_branch
          %682 = sbr.rel (%p680) target = $region40
        $region39: #{tpu_custom_call.1} parent=31 // pred_region
          %684 = vsyncadd %s676, 0
          %s685 = smul.addr %s23, 2
          %s686 = sadd.s32 %s24, %s685
          %s687 = smul.addr %s22, 4
          %s688 = sadd.s32 %s686, %s687
          %s689 = smul.addr %s688, 4
          %s690 = scalar_lea.hbm %s3, %s689
          %s691 = sshll.u32 %s679, 4
          %s692 = int_to_ptr.vmem [resolvable:$true] %s691
          %s693 = sshll.u32 %s690, 4
          %s694 = int_to_ptr.hbm [resolvable:$true] %s693
          %699 = dma.vmem_to_hbm [thread:$0]  %s692, 128, %s694, %s676, 64, 64, 4
        $region40: #{tpu_custom_call.1} parent=31 // pred_fallthru
          _
      $region32: #{tpu_custom_call.1} parent=5 // pred_fallthru
        _
      %p700 = scmp.le.s32.totalorder 2, %s12
      // Predicated region
      $region41: #{tpu_custom_call.1} parent=5 // pred_check
        %p701 = pneg %p700
      $region42: #{tpu_custom_call.1} parent=5 // pred_check_branch
        %703 = sbr.rel (%p701) target = $region44
      $region43: #{tpu_custom_call.1} parent=5 // pred_region
        %s704 = ssub.s32 %s12, 2
        // Predicated region
        $region45: #{tpu_custom_call.1} parent=43 // pred_check
          %p705 = pneg %p134
        $region46: #{tpu_custom_call.1} parent=43 // pred_check_branch
          %707 = sbr.rel (%p705) target = $region48
        $region47: #{tpu_custom_call.1} parent=43 // pred_region
          %s708 = sand.u32 %s119, 1
          %s709 = scalar_lea.sflag [#allocation4], %s708
          %s710 = sand.u32 %s119, 1
          %s711 = smul.addr %s710, 8
          %s712 = scalar_lea.vmem [#allocation3], %s711
          %714 = dma.done %s709, 128
        $region48: #{tpu_custom_call.1} parent=43 // pred_fallthru
          _
      $region44: #{tpu_custom_call.1} parent=5 // pred_fallthru
        _
    $region6: #{tpu_custom_call.1} parent=1 // loop_footer
      %s16 = sadd.s32 1, %s12
    $region7: #{tpu_custom_call.1} parent=1 // loop_footer_branch
      %11 = sbr.rel target = $region3
    $region8: #{tpu_custom_call.1} parent=1 // loop_exit
      _
    %715 = vsyncpa [#allocation4], 1
    %s716 = scalar_lea.sflag [#allocation4], 1
    %717 = vsyncpa %s716, 1

</llo_original>
